<compile_context>
chip_gen: v7x
topology: tpu7x:2x2x1
jax: 0.10.0
libtpu: 0.0.40
codegen_flags: <defaults>
</compile_context>

<pallas_src>
import jax
import jax.numpy as jnp
from jax.experimental import pallas as pl
from jax.experimental.pallas import tpu as pltpu


def _round_up(x, m):
    return ((x + m - 1) // m) * m


def _vmem_capacity_bytes():
    """Per-TensorCore VMEM capacity; conservative 64 MiB (v7x) fallback."""
    try:
        return int(pltpu.get_tpu_info().vmem_capacity_bytes)
    except Exception:
        return 64 << 20


# ----------------------------- kernels -----------------------------

def _fullres_resident_kernel(x_ref, w1_ref, b1_ref, w2_ref, b2_ref, o_ref):
    """Weights fully VMEM-resident; one grid axis over row tiles."""
    x = x_ref[...]                                   # caller dtype; reused for the residual add
    xc = x.astype(w1_ref.dtype)                      # bf16 MXU operand
    # Linear 1 (MXU, f32 accumulate) + bias + ReLU
    h = jnp.dot(xc, w1_ref[...], preferred_element_type=jnp.float32)
    h = jnp.maximum(h + b1_ref[...], 0.0)
    # Dropout: identity (eval mode).
    # Linear 2 (MXU, f32 accumulate) + bias
    y = jnp.dot(h.astype(w2_ref.dtype), w2_ref[...], preferred_element_type=jnp.float32)
    y = y + b2_ref[...]
    # Residual + final ReLU; single cast back on store.
    o_ref[...] = jnp.maximum(y + x.astype(jnp.float32), 0.0).astype(o_ref.dtype)


def _fullres_stream_kernel(x_ref, w1_ref, b1_ref, w2_ref, b2_ref, o_ref, acc_ref):
    """Weight-streaming: grid = (row tiles, hidden chunks); f32 accumulator in VMEM scratch."""
    j = pl.program_id(1)

    @pl.when(j == 0)
    def _():
        acc_ref[...] = jnp.zeros_like(acc_ref)

    x = x_ref[...]
    xc = x.astype(w1_ref.dtype)
    # Hidden-chunk j of linear-1's output is complete (full K), so the per-chunk ReLU is exact.
    h = jnp.dot(xc, w1_ref[...], preferred_element_type=jnp.float32)
    h = jnp.maximum(h + b1_ref[...], 0.0)
    # Dropout: identity (eval mode).
    acc_ref[...] += jnp.dot(h.astype(w2_ref.dtype), w2_ref[...],
                            preferred_element_type=jnp.float32)

    @pl.when(j == pl.num_programs(1) - 1)
    def _():
        y = acc_ref[...] + b2_ref[...]
        o_ref[...] = jnp.maximum(y + x.astype(jnp.float32), 0.0).astype(o_ref.dtype)


# ----------------------------- wrappers -----------------------------

def pack_fullres_params(w1, b1, w2, b2, *, compute_dtype=jnp.bfloat16):
    """Prepack (transpose + bf16 cast + 128-pad) once, outside the per-call hot path.

    w1, w2: [D, D] torch-layout (out_features, in_features). b1, b2: [D].
    """
    D = w1.shape[1]
    assert w1.shape == (D, D) and w2.shape == (D, D) and b1.shape == (D,) and b2.shape == (D,)
    D_pad = _round_up(max(D, 128), 128)
    # Zero padding keeps the math exact on the valid [:N, :D] slab (padded cols stay 0 through
    # both linears, the residual and the ReLUs).
    w1p = jnp.zeros((D_pad, D_pad), compute_dtype).at[:D, :D].set(w1.T.astype(compute_dtype))
    w2p = jnp.zeros((D_pad, D_pad), compute_dtype).at[:D, :D].set(w2.T.astype(compute_dtype))
    b1p = jnp.zeros((1, D_pad), jnp.float32).at[0, :D].set(b1.astype(jnp.float32))
    b2p = jnp.zeros((1, D_pad), jnp.float32).at[0, :D].set(b2.astype(jnp.float32))
    return dict(w1p=w1p, b1p=b1p, w2p=w2p, b2p=b2p, D=D, D_pad=D_pad,
                compute_dtype=compute_dtype)


def full_res_layer_packed(x, params, *, row_tile=512, hidden_chunk=None):
    """Fused FullResLayer forward on prepacked params. x: [..., D]."""
    D = params["D"]
    D_pad = params["D_pad"]
    compute_dtype = params["compute_dtype"]
    w1p, b1p, w2p, b2p = params["w1p"], params["b1p"], params["w2p"], params["b2p"]

    orig_shape = x.shape
    assert orig_shape[-1] == D, f"last dim {orig_shape[-1]} != packed in_dim {D}"
    x2 = x.reshape(-1, D)
    N = x2.shape[0]
    out_dtype = x.dtype

    # Row tiling: cap at row_tile, but keep >=2 grid steps when possible so the "parallel"
    # row axis can shard across both v7x TensorCores.
    if N >= 2 * row_tile:
        rt = row_tile
    elif N > 8:
        rt = min(row_tile, max(8, _round_up(-(-N // 2), 8)))
    else:
        rt = 8
    N_pad = _round_up(N, rt)

    # Fast path: skip the activation pad/copy (and the output slice) when already tile-aligned.
    needs_pad = (D != D_pad) or (N != N_pad)
    if needs_pad:
        xp = jnp.zeros((N_pad, D_pad), x2.dtype).at[:N, :D].set(x2)
    else:
        xp = x2

    # ---- VMEM provisioning (per TensorCore, generation aware). ----
    cbytes = jnp.dtype(compute_dtype).itemsize
    in_bytes = jnp.dtype(x2.dtype).itemsize
    out_bytes = jnp.dtype(out_dtype).itemsize
    cap = _vmem_capacity_bytes()
    usable = max(32 << 20, cap - (16 << 20))        # leave headroom for Mosaic internal scratch

    stream_tiles = rt * D_pad * 2 * (in_bytes + out_bytes)   # double-buffered x / out tiles
    live_interm = rt * D_pad * (2 + 4 + 2 + 4)               # xc(bf16), h(f32), h(bf16), y(f32)
    resident_est = (2 * D_pad * D_pad * cbytes               # W1, W2  (Buffered(1))
                    + 2 * D_pad * 4                          # b1, b2  (Buffered(1))
                    + stream_tiles + live_interm)

    use_stream = (hidden_chunk is not None) or (resident_est > usable)

    if not use_stream:
        vmem_est = resident_est
    else:
        def stream_est(hk_):
            return (4 * D_pad * hk_ * cbytes          # W1/W2 hidden-chunk tiles, double-buffered
                    + 2 * hk_ * 4 + D_pad * 4         # b1 chunks (x2), b2 (resident)
                    + stream_tiles
                    + rt * D_pad * (4 + 2 + 4)        # acc scratch, xc, linear-2 partial
                    + rt * hk_ * (4 + 2))             # h (f32 + bf16)

        divisors = [h for h in range(D_pad, 0, -128) if D_pad % h == 0]
        if hidden_chunk is not None:
            hk = max(128, _round_up(min(hidden_chunk, D_pad), 128))
            while D_pad % hk != 0:
                hk -= 128
        else:
            hk = divisors[-1]                         # 128: best effort if nothing fits
            for h in divisors:                        # largest hidden chunk that fits
                if stream_est(h) <= usable:
                    hk = h
                    break
        vmem_est = stream_est(hk)

    vmem_limit = int(min(usable, max(vmem_est * 5 // 4 + (4 << 20), 32 << 20)))

    if not use_stream:
        out = pl.pallas_call(
            _fullres_resident_kernel,
            out_shape=jax.ShapeDtypeStruct((N_pad, D_pad), out_dtype),
            grid_spec=pltpu.PrefetchScalarGridSpec(
                num_scalar_prefetch=0,
                grid=(N_pad // rt,),
                in_specs=[
                    pl.BlockSpec((rt, D_pad), lambda i: (i, 0)),                 # x (streamed)
                    pl.BlockSpec((D_pad, D_pad), lambda i: (0, 0),
                                 pipeline_mode=pl.Buffered(1)),                  # W1^T resident
                    pl.BlockSpec((1, D_pad), lambda i: (0, 0),
                                 pipeline_mode=pl.Buffered(1)),                  # b1 resident
                    pl.BlockSpec((D_pad, D_pad), lambda i: (0, 0),
                                 pipeline_mode=pl.Buffered(1)),                  # W2^T resident
                    pl.BlockSpec((1, D_pad), lambda i: (0, 0),
                                 pipeline_mode=pl.Buffered(1)),                  # b2 resident
                ],
                out_specs=pl.BlockSpec((rt, D_pad), lambda i: (i, 0)),
            ),
            compiler_params=pltpu.CompilerParams(
                dimension_semantics=("parallel",),
                vmem_limit_bytes=vmem_limit,
            ),
        )(xp, w1p, b1p, w2p, b2p)
    else:
        out = pl.pallas_call(
            _fullres_stream_kernel,
            out_shape=jax.ShapeDtypeStruct((N_pad, D_pad), out_dtype),
            grid_spec=pltpu.PrefetchScalarGridSpec(
                num_scalar_prefetch=0,
                grid=(N_pad // rt, D_pad // hk),
                in_specs=[
                    pl.BlockSpec((rt, D_pad), lambda i, j: (i, 0)),              # x (per row tile)
                    pl.BlockSpec((D_pad, hk), lambda i, j: (0, j)),              # W1^T chunk
                    pl.BlockSpec((1, hk), lambda i, j: (0, j)),                  # b1 chunk
                    pl.BlockSpec((hk, D_pad), lambda i, j: (j, 0)),              # W2^T chunk
                    pl.BlockSpec((1, D_pad), lambda i, j: (0, 0),
                                 pipeline_mode=pl.Buffered(1)),                  # b2 resident
                ],
                out_specs=pl.BlockSpec((rt, D_pad), lambda i, j: (i, 0)),
                scratch_shapes=[pltpu.VMEM((rt, D_pad), jnp.float32)],
            ),
            compiler_params=pltpu.CompilerParams(
                dimension_semantics=("parallel", "arbitrary"),
                vmem_limit_bytes=vmem_limit,
            ),
        )(xp, w1p, b1p, w2p, b2p)

    if needs_pad:
        out = out[:N, :D]
    return out.reshape(orig_shape)


def full_res_layer(x, w1, b1, w2, b2, *, row_tile=512, compute_dtype=jnp.bfloat16,
                   hidden_chunk=None):
    """Convenience wrapper: pack (cold path) + run (hot path)."""
    packed = pack_fullres_params(w1, b1, w2, b2, compute_dtype=compute_dtype)
    return full_res_layer_packed(x, packed, row_tile=row_tile, hidden_chunk=hidden_chunk)


# ----------------------------- reference & init -----------------------------

def init_linear(key, in_dim, out_dim):
    """Deterministic init matching torch.nn.Linear default (uniform +/- 1/sqrt(in_dim))."""
    kw, kb = jax.random.split(key)
    bound = 1.0 / jnp.sqrt(jnp.float32(in_dim))
    w = jax.random.uniform(kw, (out_dim, in_dim), jnp.float32, -bound, bound)
    b = jax.random.uniform(kb, (out_dim,), jnp.float32, -bound, bound)
    return w, b


def full_res_layer_ref(x, w1, b1, w2, b2, compute_dtype=jnp.bfloat16):
    """Pure-JAX reference with the same numerics (bf16 MXU operands, f32 accumulation)."""
    xc = x.astype(compute_dtype)
    h = jnp.dot(xc, w1.T.astype(compute_dtype), preferred_element_type=jnp.float32) + b1
    h = jnp.maximum(h, 0.0)
    y = jnp.dot(h.astype(compute_dtype), w2.T.astype(compute_dtype),
                preferred_element_type=jnp.float32) + b2
    return jnp.maximum(y + x, 0.0)


if __name__ == "__main__":
    key = jax.random.PRNGKey(0)
    k_x, k_l1, k_l2, k_x2, k_x3 = jax.random.split(key, 5)

    # 1) Small shape implied by the module: seq=8 tokens, hidden in_dim=32.
    N, D = 8, 32
    x = jax.random.normal(k_x, (N, D), jnp.float32)
    w1, b1 = init_linear(k_l1, D, D)
    w2, b2 = init_linear(k_l2, D, D)
    out = jax.block_until_ready(full_res_layer(x, w1, b1, w2, b2))
    ref = full_res_layer_ref(x, w1, b1, w2, b2)
    assert out.shape == (N, D)
    assert jnp.allclose(out, ref, atol=2e-3, rtol=2e-3), "mismatch vs reference (small shape)"

    # 2) MXU/pipeline-shaped check: 128-aligned D, 2-step row grid, prepacked weights,
    #    weight-resident path, no activation pad/slice (fast path).
    N2, D2 = 512, 256
    x2 = jax.random.normal(k_x2, (N2, D2), jnp.float32)
    w1b, b1b = init_linear(k_l1, D2, D2)
    w2b, b2b = init_linear(k_l2, D2, D2)
    packed = pack_fullres_params(w1b, b1b, w2b, b2b)
    out2 = jax.block_until_ready(full_res_layer_packed(x2, packed))
    ref2 = full_res_layer_ref(x2, w1b, b1b, w2b, b2b)
    assert out2.shape == (N2, D2)
    assert jnp.allclose(out2, ref2, atol=5e-3, rtol=5e-3), "mismatch vs reference (resident path)"

    # 3) Weight-streaming (hidden-chunked, accumulator) path forced via hidden_chunk=128.
    N3 = 256
    x3 = jax.random.normal(k_x3, (N3, D2), jnp.float32)
    out3 = jax.block_until_ready(full_res_layer_packed(x3, packed, hidden_chunk=128))
    ref3 = full_res_layer_ref(x3, w1b, b1b, w2b, b2b)
    assert out3.shape == (N3, D2)
    assert jnp.allclose(out3, ref3, atol=5e-3, rtol=5e-3), "mismatch vs reference (stream path)"

    print("KERNEL_OK")
</pallas_src>

<mosaic_0001>
module attributes {stable_mosaic.version = 11 : i64} {
  func.func @_fullres_resident_kernel(%arg0: i32, %arg1: memref<8x128xf32, #tpu.memory_space<vmem>>, %arg2: memref<128x128xbf16, #tpu.memory_space<vmem>>, %arg3: memref<1x128xf32, #tpu.memory_space<vmem>>, %arg4: memref<128x128xbf16, #tpu.memory_space<vmem>>, %arg5: memref<1x128xf32, #tpu.memory_space<vmem>>, %arg6: memref<8x128xf32, #tpu.memory_space<vmem>>) attributes {dimension_semantics = [#tpu.dimension_semantics<parallel>], iteration_bounds = array<i64: 1>, scalar_prefetch = 0 : i64, scratch_operands = 0 : i64, tpu.core_type = #tpu.core_type<tc>, window_params = [{transform_indices = @transform_0, window_bounds = array<i64: 8, 128>}, {pipeline_mode = #tpu.pipeline_mode<synchronous>, transform_indices = @transform_1, window_bounds = array<i64: 128, 128>}, {pipeline_mode = #tpu.pipeline_mode<synchronous>, transform_indices = @transform_2, window_bounds = array<i64: 1, 128>}, {pipeline_mode = #tpu.pipeline_mode<synchronous>, transform_indices = @transform_3, window_bounds = array<i64: 128, 128>}, {pipeline_mode = #tpu.pipeline_mode<synchronous>, transform_indices = @transform_4, window_bounds = array<i64: 1, 128>}, {transform_indices = @transform_5, window_bounds = array<i64: 8, 128>}]} {
    %c0 = arith.constant 0 : index
    %c0_0 = arith.constant 0 : index
    %0 = vector.load %arg1[%c0, %c0_0] : memref<8x128xf32, #tpu.memory_space<vmem>>, vector<8x128xf32>
    %1 = arith.truncf %0 : vector<8x128xf32> to vector<8x128xbf16>
    %c0_1 = arith.constant 0 : index
    %c0_2 = arith.constant 0 : index
    %2 = vector.load %arg2[%c0_1, %c0_2] : memref<128x128xbf16, #tpu.memory_space<vmem>>, vector<128x128xbf16>
    %cst = arith.constant dense<0.000000e+00> : vector<8x128xf32>
    %3 = tpu.matmul %1, %2, %cst {dimension_numbers = #tpu.dot_dimension_numbers<[1], [0], [0], [1], [0, 0, 1, 1], [], []>} : vector<8x128xbf16>, vector<128x128xbf16>, vector<8x128xf32> -> vector<8x128xf32>
    %c0_3 = arith.constant 0 : index
    %c0_4 = arith.constant 0 : index
    %4 = vector.load %arg3[%c0_3, %c0_4] : memref<1x128xf32, #tpu.memory_space<vmem>>, vector<1x128xf32>
    %5 = vector.broadcast %4 : vector<1x128xf32> to vector<8x128xf32>
    %6 = arith.addf %3, %5 : vector<8x128xf32>
    %cst_5 = arith.constant 0.000000e+00 : f32
    %7 = vector.broadcast %cst_5 : f32 to vector<8x128xf32>
    %8 = arith.maximumf %6, %7 : vector<8x128xf32>
    %9 = arith.truncf %8 : vector<8x128xf32> to vector<8x128xbf16>
    %c0_6 = arith.constant 0 : index
    %c0_7 = arith.constant 0 : index
    %10 = vector.load %arg4[%c0_6, %c0_7] : memref<128x128xbf16, #tpu.memory_space<vmem>>, vector<128x128xbf16>
    %cst_8 = arith.constant dense<0.000000e+00> : vector<8x128xf32>
    %11 = tpu.matmul %9, %10, %cst_8 {dimension_numbers = #tpu.dot_dimension_numbers<[1], [0], [0], [1], [0, 0, 1, 1], [], []>} : vector<8x128xbf16>, vector<128x128xbf16>, vector<8x128xf32> -> vector<8x128xf32>
    %c0_9 = arith.constant 0 : index
    %c0_10 = arith.constant 0 : index
    %12 = vector.load %arg5[%c0_9, %c0_10] : memref<1x128xf32, #tpu.memory_space<vmem>>, vector<1x128xf32>
    %13 = vector.broadcast %12 : vector<1x128xf32> to vector<8x128xf32>
    %14 = arith.addf %11, %13 : vector<8x128xf32>
    %15 = arith.addf %14, %0 : vector<8x128xf32>
    %cst_11 = arith.constant 0.000000e+00 : f32
    %16 = vector.broadcast %cst_11 : f32 to vector<8x128xf32>
    %17 = arith.maximumf %15, %16 : vector<8x128xf32>
    %c0_12 = arith.constant 0 : index
    %c0_13 = arith.constant 0 : index
    %18 = vector.load %arg6[%c0_12, %c0_13] : memref<8x128xf32, #tpu.memory_space<vmem>>, vector<8x128xf32>
    tpu.vector_store %arg6[%c0_12, %c0_13], %17 {strides = array<i32>} : memref<8x128xf32, #tpu.memory_space<vmem>>, vector<8x128xf32>,
    return
  }
  func.func @transform_0(%arg0: i32) -> (i32, i32) {
    %c0_i32 = arith.constant 0 : i32
    %c0_i32_0 = arith.constant 0 : i32
    return %arg0, %c0_i32 : i32, i32
  }
  func.func @transform_1(%arg0: i32) -> (i32, i32) {
    %c0_i32 = arith.constant 0 : i32
    %c0_i32_0 = arith.constant 0 : i32
    %c0_i32_1 = arith.constant 0 : i32
    return %c0_i32, %c0_i32_0 : i32, i32
  }
  func.func @transform_2(%arg0: i32) -> (i32, i32) {
    %c0_i32 = arith.constant 0 : i32
    %c0_i32_0 = arith.constant 0 : i32
    %c0_i32_1 = arith.constant 0 : i32
    return %c0_i32, %c0_i32_0 : i32, i32
  }
  func.func @transform_3(%arg0: i32) -> (i32, i32) {
    %c0_i32 = arith.constant 0 : i32
    %c0_i32_0 = arith.constant 0 : i32
    %c0_i32_1 = arith.constant 0 : i32
    return %c0_i32, %c0_i32_0 : i32, i32
  }
  func.func @transform_4(%arg0: i32) -> (i32, i32) {
    %c0_i32 = arith.constant 0 : i32
    %c0_i32_0 = arith.constant 0 : i32
    %c0_i32_1 = arith.constant 0 : i32
    return %c0_i32, %c0_i32_0 : i32, i32
  }
  func.func @transform_5(%arg0: i32) -> (i32, i32) {
    %c0_i32 = arith.constant 0 : i32
    %c0_i32_0 = arith.constant 0 : i32
    return %arg0, %c0_i32 : i32, i32
  }
}

</mosaic_0001>

<llo_original>
// kernel: tpu_custom_call.1
$region0: #{tpu_custom_call.1}
  #allocation0 [shape = 'u32[]', space=smem, size = 0x4, offset = 0x4, fixed_abs, tag = 'smem constant byte address 0x4 - core index']
  #allocation1 [shape = 'u32[144,128]{1,0:T(1,128)}', space=vmem, size = 0x12000, scoped, tag = 'internal scratch']
  %s0 = inlined_call_operand.hbm [shape: f32[8,128], index: 0, kind: input, shape index: {}]
  %s1 = inlined_call_operand.hbm [shape: bf16[128,128], index: 1, kind: input, shape index: {}]
  %s2 = inlined_call_operand.vmem [shape: f32[1,128], index: 2, kind: input, shape index: {}]
  %s3 = inlined_call_operand.hbm [shape: bf16[128,128], index: 3, kind: input, shape index: {}]
  %s4 = inlined_call_operand.vmem [shape: f32[1,128], index: 4, kind: input, shape index: {}]
  %s5 = inlined_call_operand.hbm [shape: f32[8,128], index: 5, kind: output, shape index: {}]
  %s6 = sld [smem:[#allocation0]]
  $region42: #{tpu_custom_call.1} parent=0
    _
  %s8 = ssub.s32 1, %s6
  %s9 = scalar_select 0, %s8, %s6
  $region1: #{tpu_custom_call.1} parent=0
    #allocation2 [shape = 'u8[4096]{0}', space=vmem, size = 0x1000, scoped, tag = 'input window, operand 0, single buffered']
    #allocation3 [shape = 's32[1]{0}', space=sflag, size = 0x4, scoped, tag = 'scoped memory for tpu_custom_call.1']
    #allocation4 [shape = 's32[1]{0}', space=sflag, size = 0x4, scoped, tag = 'scoped memory for tpu_custom_call.1']
    #allocation5 [shape = 'u8[32768]{0}', space=vmem, size = 0x8000, scoped, tag = 'input window, operand 1, single buffered']
    #allocation6 [shape = 's32[1]{0}', space=sflag, size = 0x4, scoped, tag = 'scoped memory for tpu_custom_call.1']
    #allocation7 [shape = 'u8[32768]{0}', space=vmem, size = 0x8000, scoped, tag = 'input window, operand 3, single buffered']
    #allocation8 [shape = 'u8[4096]{0}', space=vmem, size = 0x1000, scoped, tag = 'output window, operand 0, single buffered']
    %10 = vsyncpa [#allocation3], 0
    %11 = vsyncpa [#allocation6], 0
    %12 = vsyncpa [#allocation4], 0
    // Predicated region
    $region2: #{tpu_custom_call.1} parent=1 // pred_check
      _
    $region3: #{tpu_custom_call.1} parent=1 // pred_check_branch
      %14 = sbr.rel (0) target = $region5
    $region4: #{tpu_custom_call.1} parent=1 // pred_region
      %s16 = ssub.s32 128, 128
      %17 = vsyncadd [#allocation3], %s16
      %s19 = sshll.u32 [#allocation2], 4
      %s20 = int_to_ptr.vmem [resolvable:$true] %s19
      %22 = dma.hbm_to_vmem [thread:$0]  %s0, 128, %s20, [#allocation3]
    $region5: #{tpu_custom_call.1} parent=1 // pred_fallthru
      _
    // Predicated region
    $region6: #{tpu_custom_call.1} parent=1 // pred_check
      _
    $region7: #{tpu_custom_call.1} parent=1 // pred_check_branch
      %24 = sbr.rel (0) target = $region9
    $region8: #{tpu_custom_call.1} parent=1 // pred_region
      %s26 = ssub.s32 1024, 1024
      %27 = vsyncadd [#allocation6], %s26
      %s28 = sshll.u32 [#allocation5], 4
      %s29 = int_to_ptr.vmem [resolvable:$true] %s28
      %34 = dma.hbm_to_vmem [thread:$0]  %s1, 1024, %s29, [#allocation6], 64, 64, 4
    $region9: #{tpu_custom_call.1} parent=1 // pred_fallthru
      _
    // Predicated region
    $region10: #{tpu_custom_call.1} parent=1 // pred_check
      _
    $region11: #{tpu_custom_call.1} parent=1 // pred_check_branch
      %36 = sbr.rel (0) target = $region13
    $region12: #{tpu_custom_call.1} parent=1 // pred_region
      _
    $region13: #{tpu_custom_call.1} parent=1 // pred_fallthru
      _
    // Predicated region
    $region14: #{tpu_custom_call.1} parent=1 // pred_check
      _
    $region15: #{tpu_custom_call.1} parent=1 // pred_check_branch
      %38 = sbr.rel (0) target = $region17
    $region16: #{tpu_custom_call.1} parent=1 // pred_region
      %s40 = ssub.s32 1024, 1024
      %41 = vsyncadd [#allocation6], %s40
      %s42 = sshll.u32 [#allocation7], 4
      %s43 = int_to_ptr.vmem [resolvable:$true] %s42
      %48 = dma.hbm_to_vmem [thread:$0]  %s3, 1024, %s43, [#allocation6], 64, 64, 4
    $region17: #{tpu_custom_call.1} parent=1 // pred_fallthru
      _
    // Predicated region
    $region18: #{tpu_custom_call.1} parent=1 // pred_check
      _
    $region19: #{tpu_custom_call.1} parent=1 // pred_check_branch
      %50 = sbr.rel (0) target = $region21
    $region20: #{tpu_custom_call.1} parent=1 // pred_region
      _
    $region21: #{tpu_custom_call.1} parent=1 // pred_fallthru
      _
    // Predicated region
    $region22: #{tpu_custom_call.1} parent=1 // pred_check
      _
    $region23: #{tpu_custom_call.1} parent=1 // pred_check_branch
      %52 = sbr.rel (0) target = $region25
    $region24: #{tpu_custom_call.1} parent=1 // pred_region
      %53 = dma.done [#allocation3], 128
    $region25: #{tpu_custom_call.1} parent=1 // pred_fallthru
      _
    // Predicated region
    $region26: #{tpu_custom_call.1} parent=1 // pred_check
      _
    $region27: #{tpu_custom_call.1} parent=1 // pred_check_branch
      %55 = sbr.rel (0) target = $region29
    $region28: #{tpu_custom_call.1} parent=1 // pred_region
      %56 = dma.done [#allocation6], 1024
    $region29: #{tpu_custom_call.1} parent=1 // pred_fallthru
      _
    // Predicated region
    $region30: #{tpu_custom_call.1} parent=1 // pred_check
      _
    $region31: #{tpu_custom_call.1} parent=1 // pred_check_branch
      %58 = sbr.rel (0) target = $region33
    $region32: #{tpu_custom_call.1} parent=1 // pred_region
      %59 = dma.done [#allocation6], 1024
    $region33: #{tpu_custom_call.1} parent=1 // pred_fallthru
      _
    %v61 = vld [vmem:[#allocation2] sm:$0xff]
    %v62 = vpack.c.bf16 %v61, %v61
    %v63 = vld [vmem:[#allocation5] sm:$0xf]
    %v64 = vld [vmem:[#allocation5 + $0x4] sm:$0xf]
    %v65 = vld [vmem:[#allocation5 + $0x8] sm:$0xf]
    %v66 = vld [vmem:[#allocation5 + $0xc] sm:$0xf]
    %v67 = vld [vmem:[#allocation5 + $0x10] sm:$0xf]
    %v68 = vld [vmem:[#allocation5 + $0x14] sm:$0xf]
    %v69 = vld [vmem:[#allocation5 + $0x18] sm:$0xf]
    %v70 = vld [vmem:[#allocation5 + $0x1c] sm:$0xf]
    %v71 = vld [vmem:[#allocation5 + $0x20] sm:$0xf]
    %v72 = vld [vmem:[#allocation5 + $0x24] sm:$0xf]
    %v73 = vld [vmem:[#allocation5 + $0x28] sm:$0xf]
    %v74 = vld [vmem:[#allocation5 + $0x2c] sm:$0xf]
    %v75 = vld [vmem:[#allocation5 + $0x30] sm:$0xf]
    %v76 = vld [vmem:[#allocation5 + $0x34] sm:$0xf]
    %v77 = vld [vmem:[#allocation5 + $0x38] sm:$0xf]
    %v78 = vld [vmem:[#allocation5 + $0x3c] sm:$0xf]
    %v79 = vld [vmem:[%s2] sm:$0x1]
    %v81 = vlaneseq
    %v82 = vshrl.u32 %v81, 7
    %v83 = vsub.s32 0, %v82
    %v84 = vrot.slane %v79, %v83
    %v102 = vunpack.c.l.b16 %v63
    %v103 = vunpack.c.l.b16 %v64
    %v104 = vunpack.c.l.b16 %v65
    %v105 = vunpack.c.l.b16 %v66
    %v106 = vunpack.c.l.b16 %v67
    %v107 = vunpack.c.l.b16 %v68
    %v108 = vunpack.c.l.b16 %v69
    %v109 = vunpack.c.l.b16 %v70
    %v110 = vunpack.c.l.b16 %v71
    %v111 = vunpack.c.l.b16 %v72
    %v112 = vunpack.c.l.b16 %v73
    %v113 = vunpack.c.l.b16 %v74
    %v114 = vunpack.c.l.b16 %v75
    %v115 = vunpack.c.l.b16 %v76
    %v116 = vunpack.c.l.b16 %v77
    %v117 = vunpack.c.l.b16 %v78
    %v118 = vpack.c.b16 %v103, %v102
    %v119 = vpack.c.b16 %v105, %v104
    %v120 = vpack.c.b16 %v107, %v106
    %v121 = vpack.c.b16 %v109, %v108
    %v122 = vpack.c.b16 %v111, %v110
    %v123 = vpack.c.b16 %v113, %v112
    %v124 = vpack.c.b16 %v115, %v114
    %v125 = vpack.c.b16 %v117, %v116
    %134 = vmatprep.subr.bf16.mxu0 0
    %135 = vmatpush1.bf16.msra.mxu0 %v118
    %136 = vmatprep.subr.bf16.mxu0 0
    %137 = vmatpush1.bf16.msra.mxu0 %v119
    %138 = vmatprep.subr.bf16.mxu0 0
    %139 = vmatpush1.bf16.msra.mxu0 %v120
    %140 = vmatprep.subr.bf16.mxu0 0
    %141 = vmatpush1.bf16.msra.mxu0 %v121
    %142 = vmatprep.subr.bf16.mxu0 0
    %143 = vmatpush1.bf16.msra.mxu0 %v122
    %144 = vmatprep.subr.bf16.mxu0 0
    %145 = vmatpush1.bf16.msra.mxu0 %v123
    %146 = vmatprep.subr.bf16.mxu0 0
    %147 = vmatpush1.bf16.msra.mxu0 %v124
    %148 = vmatprep.subr.bf16.mxu0 0
    %149 = vmatpush1.bf16.msra.mxu0 %v125
    %150 = vmatprep.subr.bf16.mxu0 0
    %151 = vmatpush1.bf16.msra.mxu0 0
    %152 = vmatprep.subr.bf16.mxu0 0
    %153 = vmatpush1.bf16.msra.mxu0 0
    %154 = vmatprep.subr.bf16.mxu0 0
    %155 = vmatpush1.bf16.msra.mxu0 0
    %156 = vmatprep.subr.bf16.mxu0 0
    %157 = vmatpush1.bf16.msra.mxu0 0
    %158 = vmatprep.subr.bf16.mxu0 0
    %159 = vmatpush1.bf16.msra.mxu0 0
    %160 = vmatprep.subr.bf16.mxu0 0
    %161 = vmatpush1.bf16.msra.mxu0 0
    %162 = vmatprep.subr.bf16.mxu0 0
    %163 = vmatpush1.bf16.msra.mxu0 0
    %164 = vmatprep.subr.bf16.mxu0 0
    %165 = vmatpush1.bf16.msra.mxu0 0
    %166 = vmatprep.mubr.bf16.mxu0 0
    %167 = vmatmul.mubr.bf16.gmra.mrb[0].mxu0 %v62
    %v168 = vpop.f32.mrb[0].mxu0
    %v169 = vadd.f32 %v84, %v168
    %v170 = vpop.f32.mrb[0].mxu0
    %v171 = vpop.f32.mrb[0].mxu0
    %v172 = vpop.f32.mrb[0].mxu0
    %173 = vdwg.mxu0
    %v174 = vmax.f32 %v169, 0.0
    %v175 = vpack.c.bf16 %v174, %v174
    %v176 = vld [vmem:[#allocation7] sm:$0xf]
    %v177 = vld [vmem:[#allocation7 + $0x4] sm:$0xf]
    %v178 = vld [vmem:[#allocation7 + $0x8] sm:$0xf]
    %v179 = vld [vmem:[#allocation7 + $0xc] sm:$0xf]
    %v180 = vld [vmem:[#allocation7 + $0x10] sm:$0xf]
    %v181 = vld [vmem:[#allocation7 + $0x14] sm:$0xf]
    %v182 = vld [vmem:[#allocation7 + $0x18] sm:$0xf]
    %v183 = vld [vmem:[#allocation7 + $0x1c] sm:$0xf]
    %v184 = vld [vmem:[#allocation7 + $0x20] sm:$0xf]
    %v185 = vld [vmem:[#allocation7 + $0x24] sm:$0xf]
    %v186 = vld [vmem:[#allocation7 + $0x28] sm:$0xf]
    %v187 = vld [vmem:[#allocation7 + $0x2c] sm:$0xf]
    %v188 = vld [vmem:[#allocation7 + $0x30] sm:$0xf]
    %v189 = vld [vmem:[#allocation7 + $0x34] sm:$0xf]
    %v190 = vld [vmem:[#allocation7 + $0x38] sm:$0xf]
    %v191 = vld [vmem:[#allocation7 + $0x3c] sm:$0xf]
    %v192 = vld [vmem:[%s4] sm:$0x1]
    %v194 = vlaneseq
    %v195 = vshrl.u32 %v194, 7
    %v196 = vsub.s32 0, %v195
    %v197 = vrot.slane %v192, %v196
    %v215 = vunpack.c.l.b16 %v176
    %v216 = vunpack.c.l.b16 %v177
    %v217 = vunpack.c.l.b16 %v178
    %v218 = vunpack.c.l.b16 %v179
    %v219 = vunpack.c.l.b16 %v180
    %v220 = vunpack.c.l.b16 %v181
    %v221 = vunpack.c.l.b16 %v182
    %v222 = vunpack.c.l.b16 %v183
    %v223 = vunpack.c.l.b16 %v184
    %v224 = vunpack.c.l.b16 %v185
    %v225 = vunpack.c.l.b16 %v186
    %v226 = vunpack.c.l.b16 %v187
    %v227 = vunpack.c.l.b16 %v188
    %v228 = vunpack.c.l.b16 %v189
    %v229 = vunpack.c.l.b16 %v190
    %v230 = vunpack.c.l.b16 %v191
    %v231 = vpack.c.b16 %v216, %v215
    %v232 = vpack.c.b16 %v218, %v217
    %v233 = vpack.c.b16 %v220, %v219
    %v234 = vpack.c.b16 %v222, %v221
    %v235 = vpack.c.b16 %v224, %v223
    %v236 = vpack.c.b16 %v226, %v225
    %v237 = vpack.c.b16 %v228, %v227
    %v238 = vpack.c.b16 %v230, %v229
    %247 = vmatprep.subr.bf16.mxu0 0
    %248 = vmatpush1.bf16.msra.mxu0 %v231
    %249 = vmatprep.subr.bf16.mxu0 0
    %250 = vmatpush1.bf16.msra.mxu0 %v232
    %251 = vmatprep.subr.bf16.mxu0 0
    %252 = vmatpush1.bf16.msra.mxu0 %v233
    %253 = vmatprep.subr.bf16.mxu0 0
    %254 = vmatpush1.bf16.msra.mxu0 %v234
    %255 = vmatprep.subr.bf16.mxu0 0
    %256 = vmatpush1.bf16.msra.mxu0 %v235
    %257 = vmatprep.subr.bf16.mxu0 0
    %258 = vmatpush1.bf16.msra.mxu0 %v236
    %259 = vmatprep.subr.bf16.mxu0 0
    %260 = vmatpush1.bf16.msra.mxu0 %v237
    %261 = vmatprep.subr.bf16.mxu0 0
    %262 = vmatpush1.bf16.msra.mxu0 %v238
    %263 = vmatprep.subr.bf16.mxu0 0
    %264 = vmatpush1.bf16.msra.mxu0 0
    %265 = vmatprep.subr.bf16.mxu0 0
    %266 = vmatpush1.bf16.msra.mxu0 0
    %267 = vmatprep.subr.bf16.mxu0 0
    %268 = vmatpush1.bf16.msra.mxu0 0
    %269 = vmatprep.subr.bf16.mxu0 0
    %270 = vmatpush1.bf16.msra.mxu0 0
    %271 = vmatprep.subr.bf16.mxu0 0
    %272 = vmatpush1.bf16.msra.mxu0 0
    %273 = vmatprep.subr.bf16.mxu0 0
    %274 = vmatpush1.bf16.msra.mxu0 0
    %275 = vmatprep.subr.bf16.mxu0 0
    %276 = vmatpush1.bf16.msra.mxu0 0
    %277 = vmatprep.subr.bf16.mxu0 0
    %278 = vmatpush1.bf16.msra.mxu0 0
    %279 = vmatprep.mubr.bf16.mxu0 0
    %280 = vmatmul.mubr.bf16.gmra.mrb[0].mxu0 %v175
    %v281 = vpop.f32.mrb[0].mxu0
    %v282 = vadd.f32 %v197, %v281
    %v283 = vpop.f32.mrb[0].mxu0
    %v284 = vpop.f32.mrb[0].mxu0
    %v285 = vpop.f32.mrb[0].mxu0
    %286 = vdwg.mxu0
    %v287 = vadd.f32 %v282, %v61
    %v288 = vmax.f32 %v287, 0.0
    %289 = vst [vmem:[#allocation8] sm:$0xff] %v288
    // Predicated region
    $region34: #{tpu_custom_call.1} parent=1 // pred_check
      _
    $region35: #{tpu_custom_call.1} parent=1 // pred_check_branch
      %291 = sbr.rel (0) target = $region37
    $region36: #{tpu_custom_call.1} parent=1 // pred_region
      %s293 = ssub.s32 128, 128
      %294 = vsyncadd [#allocation4], %s293
      %s296 = sshll.u32 [#allocation8], 4
      %s297 = int_to_ptr.vmem [resolvable:$true] %s296
      %299 = dma.vmem_to_hbm [thread:$0]  %s297, 128, %s5, [#allocation4]
    $region37: #{tpu_custom_call.1} parent=1 // pred_fallthru
      _
    // Predicated region
    $region38: #{tpu_custom_call.1} parent=1 // pred_check
      _
    $region39: #{tpu_custom_call.1} parent=1 // pred_check_branch
      %301 = sbr.rel (0) target = $region41
    $region40: #{tpu_custom_call.1} parent=1 // pred_region
      %302 = dma.done [#allocation4], 128
    $region41: #{tpu_custom_call.1} parent=1 // pred_fallthru
      _
    %303 = vsyncpa [#allocation3], 1
    %304 = vsyncpa [#allocation6], 1
    %305 = vsyncpa [#allocation4], 1

</llo_original>
